<compile_context>
chip_gen: v7x
topology: tpu7x:2x2x1
jax: 0.10.0
libtpu: 0.0.40
codegen_flags: <defaults>
</compile_context>

<pallas_src>
import functools

import jax
import jax.numpy as jnp
from jax.experimental import pallas as pl
from jax.experimental.pallas import tpu as pltpu


def _round_up(x, m):
    return ((x + m - 1) // m) * m


def _cdiv(a, b):
    return (a + b - 1) // b


def _fused_mlp_kernel(trip_ref, p_ref, w2_ref, b2_ref, o_ref, *, n_nodes):
    """One TILE_T-wide slab of triplets -> sigmoid link scores.

    trip_ref : (tuple_len, TILE_T) int32   triplet node indices (transposed, streamed)
    p_ref    : (H, K_pad)  mxu_dtype       fused table: W1 pre-contracted with the node
                                           table per tuple slot, + one b1 bias column,
                                           zero-padded to K_pad lanes (VMEM-resident)
    w2_ref   : (H, 1) f32                  output-layer weight (column, VMEM-resident)
    b2_ref   : (1,)   f32  (SMEM)          output-layer bias (scalar)
    o_ref    : (1, TILE_T) f32             lane-dense output row
    """
    tuple_len, tile_t = trip_ref.shape
    _, k_pad = p_ref.shape
    bias_row = tuple_len * n_nodes

    # Combined one-hot:  onehot[k*N + trip[k,t], t] = 1  (valid indices only)
    #                    onehot[bias_row, t]       = 1   (folds b1 into the matmul)
    row_ids = jax.lax.broadcasted_iota(jnp.int32, (k_pad, tile_t), 0)
    hot = row_ids == bias_row
    for k in range(tuple_len):                              # static, tiny unroll
        idx_k = trip_ref[pl.ds(k, 1), :]                    # (1, TILE_T) int32
        valid = (idx_k >= 0) & (idx_k < n_nodes)
        tgt = jnp.where(valid, idx_k + k * n_nodes, -1)     # OOB -> never matches
        hot = hot | (row_ids == tgt)
    onehot = hot.astype(p_ref.dtype)                        # 0/1 exact in bf16

    # Layer 0 (gather + Linear + bias) as ONE MXU matmul, f32 accumulate.
    acc = jnp.dot(p_ref[...], onehot,
                  preferred_element_type=jnp.float32)       # (H, TILE_T) f32

    hid = jnp.maximum(acc, 0.0)                             # ReLU on VPU (f32)

    # Output layer (H -> 1): VPU multiply + sublane (XLU) reduction, sigmoid on EUP.
    z = jnp.sum(hid * w2_ref[...], axis=0, keepdims=True) + b2_ref[0]
    o_ref[...] = jax.nn.sigmoid(z).astype(o_ref.dtype)


def _choose_tile_t(t, desired, per_col_bytes, vmem_budget):
    """Pick a lane-aligned T tile: big enough to amortize per-step overhead,
    balanced so the last padded tile isn't wasted, >=2 tiles when there is
    enough work (v7x megacore), and within a conservative VMEM budget."""
    t128 = max(128, _round_up(t, 128))
    tile = min(max(128, _round_up(desired, 128)), t128)
    min_tiles = 2 if t128 >= 256 else 1
    num = max(_cdiv(t128, tile), min_tiles)
    tile = _round_up(_cdiv(t128, num), 128)                 # rebalance last tile
    while tile > 128 and tile * per_col_bytes > vmem_budget:
        tile -= 128                                         # v7x VMEM gating
    num = _cdiv(t128, tile)
    return tile, num


def nn_predictor_forward(h, triplets, params, *, tile_t=2048, mxu_dtype=jnp.bfloat16):
    """h: (N, in_feats) node embeddings; triplets: (T, tuple_len) int node indices.

    Returns sigmoid link scores of shape (T, 1), matching the PyTorch module's
    forward() with the default num_layers=2 topology.
    """
    w1, b1, w2, b2 = params
    n_nodes, in_feats = h.shape
    t, tuple_len = triplets.shape
    h_feats = w1.shape[1]

    k_raw = tuple_len * n_nodes
    k_pad = _round_up(k_raw + 1, 128)                       # +1 bias row, lane-pad

    # Wrapper-side precompute (cheap, O(N*F*H*L)): fuse W1 with the node table.
    #   P[h, k*N + n] = sum_f h[n, f] * w1[k*F + f, h];   P[:, k_raw] = b1
    w1_r = w1.astype(jnp.float32).reshape(tuple_len, in_feats, h_feats)
    p = jnp.einsum('nf,lfh->hln', h.astype(jnp.float32), w1_r,
                   precision=jax.lax.Precision.HIGHEST)
    p = p.reshape(h_feats, k_raw)
    p = jnp.concatenate([p, b1.reshape(h_feats, 1).astype(jnp.float32)], axis=1)
    p = jnp.pad(p, ((0, 0), (0, k_pad - (k_raw + 1)))).astype(mxu_dtype)

    # Per-column VMEM footprint estimate (bytes) for tile gating.
    itemsize = jnp.dtype(mxu_dtype).itemsize
    per_col_bytes = (2 * tuple_len * 4            # double-buffered streamed indices
                     + k_pad * (4 + itemsize)     # iota/compare + one-hot operand
                     + 2 * h_feats * 4            # acc + hid (f32)
                     + 2 * 4)                     # double-buffered output row
    resident_bytes = h_feats * (k_pad * itemsize + 4)
    vmem_budget = max(20 * 1024 * 1024 - resident_bytes, per_col_bytes * 128)

    tile, num_tiles = _choose_tile_t(t, tile_t, per_col_bytes, vmem_budget)
    t_pad = num_tiles * tile

    # Layout glue (fuses with the caller's jit): triplet/row axis on the lane axis.
    trip_pad = jnp.pad(triplets.astype(jnp.int32), ((0, t_pad - t), (0, 0)))
    trip_t = trip_pad.T                                     # (tuple_len, T_pad)
    w2_c = w2.astype(jnp.float32).reshape(h_feats, 1)
    b2_s = b2.astype(jnp.float32).reshape(1)                # scalar -> SMEM

    kernel = functools.partial(_fused_mlp_kernel, n_nodes=n_nodes)

    out_row = pl.pallas_call(
        kernel,
        out_shape=jax.ShapeDtypeStruct((1, t_pad), jnp.float32),
        grid=(num_tiles,),
        in_specs=[
            pl.BlockSpec((tuple_len, tile), lambda i: (0, i)),   # streamed per tile
            pl.BlockSpec((h_feats, k_pad), lambda i: (0, 0)),    # VMEM-resident P
            pl.BlockSpec((h_feats, 1), lambda i: (0, 0)),        # VMEM-resident w2
            pl.BlockSpec(memory_space=pltpu.MemorySpace.SMEM),   # b2 scalar
        ],
        out_specs=pl.BlockSpec((1, tile), lambda i: (0, i)),     # lane-dense row
        compiler_params=pltpu.CompilerParams(
            dimension_semantics=("parallel",),
            vmem_limit_bytes=32 * 1024 * 1024,
        ),
    )(trip_t, p, w2_c, b2_s)

    return out_row[0, :t].reshape(t, 1)


def init_params(key, in_feats_total, h_feats):
    # Deterministic synthetic init (uniform, PyTorch-Linear-style bounds).
    k1, k2, k3, k4 = jax.random.split(key, 4)
    bound1 = 1.0 / jnp.sqrt(in_feats_total)
    bound2 = 1.0 / jnp.sqrt(h_feats)
    w1 = jax.random.uniform(k1, (in_feats_total, h_feats), jnp.float32, -bound1, bound1)
    b1 = jax.random.uniform(k2, (1, h_feats), jnp.float32, -bound1, bound1)
    w2 = jax.random.uniform(k3, (h_feats, 1), jnp.float32, -bound2, bound2)
    b2 = jax.random.uniform(k4, (1, 1), jnp.float32, -bound2, bound2)
    return w1, b1, w2, b2


if __name__ == "__main__":
    # Small shapes consistent with the module: per-node embedding dim in_feats=4,
    # input_tuple_length=3 -> total in_feats=12, h_feats=32, num_layers=2 (default),
    # T=8 triplets, N=16 nodes.
    key = jax.random.PRNGKey(0)
    k_h, k_t, k_p = jax.random.split(key, 3)

    N, in_feats, tuple_len, h_feats, T = 16, 4, 3, 32, 8
    h = jax.random.normal(k_h, (N, in_feats), jnp.float32)
    triplets = jax.random.randint(k_t, (T, tuple_len), 0, N, dtype=jnp.int32)
    params = init_params(k_p, tuple_len * in_feats, h_feats)

    fwd = jax.jit(nn_predictor_forward)
    out = fwd(h, triplets, params)
    jax.block_until_ready(out)

    # Pure-JAX reference (exact f32 matmuls so the comparison is meaningful).
    w1, b1, w2, b2 = params
    tm = h[triplets].reshape(T, tuple_len * in_feats)
    hid = jnp.maximum(jnp.dot(tm, w1, precision=jax.lax.Precision.HIGHEST) + b1, 0.0)
    ref = jax.nn.sigmoid(jnp.dot(hid, w2, precision=jax.lax.Precision.HIGHEST) + b2)

    assert out.shape == (T, 1)
    # Tolerance covers bf16 rounding of the fused P table (~1e-3 rel) feeding the
    # f32-accumulated MXU matmul; real bugs would be O(1e-1) off.
    assert jnp.allclose(out, ref, atol=5e-3), "mismatch vs reference"

    print("KERNEL_OK")
</pallas_src>

<mosaic_0001>
module attributes {stable_mosaic.version = 11 : i64} {
  func.func @_fused_mlp_kernel(%arg0: i32, %arg1: memref<3x128xi32, #tpu.memory_space<vmem>>, %arg2: memref<32x128xbf16, #tpu.memory_space<vmem>>, %arg3: memref<32x1xf32, #tpu.memory_space<vmem>>, %arg4: memref<1xf32, #tpu.memory_space<smem>>, %arg5: memref<1x128xf32, #tpu.memory_space<vmem>>) attributes {dimension_semantics = [#tpu.dimension_semantics<parallel>], iteration_bounds = array<i64: 1>, scalar_prefetch = 0 : i64, scratch_operands = 0 : i64, tpu.core_type = #tpu.core_type<tc>, window_params = [{transform_indices = @transform_0, window_bounds = array<i64: 3, 128>}, {pipeline_mode = #tpu.pipeline_mode<synchronous>, transform_indices = @transform_1, window_bounds = array<i64: 32, 128>}, {pipeline_mode = #tpu.pipeline_mode<synchronous>, transform_indices = @transform_2, window_bounds = array<i64: 32, 1>}, {transform_indices = @transform_3, window_bounds = array<i64: 1>}, {transform_indices = @transform_4, window_bounds = array<i64: 1, 128>}]} {
    %0 = tpu.iota {dimensions = array<i32: 0>} : vector<128x128xi32>
    %c48_i32 = arith.constant 48 : i32
    %1 = vector.broadcast %c48_i32 : i32 to vector<128x128xi32>
    %2 = arith.cmpi eq, %0, %1 : vector<128x128xi32>
    %c0 = arith.constant 0 : index
    %c0_0 = arith.constant 0 : index
    %3 = vector.load %arg1[%c0, %c0_0] : memref<3x128xi32, #tpu.memory_space<vmem>>, vector<1x128xi32>
    %c0_i32 = arith.constant 0 : i32
    %4 = vector.broadcast %c0_i32 : i32 to vector<1x128xi32>
    %5 = arith.cmpi sge, %3, %4 : vector<1x128xi32>
    %c16_i32 = arith.constant 16 : i32
    %6 = vector.broadcast %c16_i32 : i32 to vector<1x128xi32>
    %7 = arith.cmpi slt, %3, %6 : vector<1x128xi32>
    %8 = arith.andi %5, %7 : vector<1x128xi1>
    %c0_i32_1 = arith.constant 0 : i32
    %9 = vector.broadcast %c0_i32_1 : i32 to vector<1x128xi32>
    %10 = arith.addi %3, %9 : vector<1x128xi32>
    %c-1_i32 = arith.constant -1 : i32
    %11 = vector.broadcast %c-1_i32 : i32 to vector<1x128xi32>
    %12 = arith.select %8, %10, %11 : vector<1x128xi1>, vector<1x128xi32>
    %13 = vector.broadcast %12 : vector<1x128xi32> to vector<128x128xi32>
    %14 = arith.cmpi eq, %0, %13 : vector<128x128xi32>
    %15 = arith.ori %2, %14 : vector<128x128xi1>
    %c1 = arith.constant 1 : index
    %c0_2 = arith.constant 0 : index
    %16 = vector.load %arg1[%c1, %c0_2] : memref<3x128xi32, #tpu.memory_space<vmem>>, vector<1x128xi32>
    %c0_i32_3 = arith.constant 0 : i32
    %17 = vector.broadcast %c0_i32_3 : i32 to vector<1x128xi32>
    %18 = arith.cmpi sge, %16, %17 : vector<1x128xi32>
    %c16_i32_4 = arith.constant 16 : i32
    %19 = vector.broadcast %c16_i32_4 : i32 to vector<1x128xi32>
    %20 = arith.cmpi slt, %16, %19 : vector<1x128xi32>
    %21 = arith.andi %18, %20 : vector<1x128xi1>
    %c16_i32_5 = arith.constant 16 : i32
    %22 = vector.broadcast %c16_i32_5 : i32 to vector<1x128xi32>
    %23 = arith.addi %16, %22 : vector<1x128xi32>
    %c-1_i32_6 = arith.constant -1 : i32
    %24 = vector.broadcast %c-1_i32_6 : i32 to vector<1x128xi32>
    %25 = arith.select %21, %23, %24 : vector<1x128xi1>, vector<1x128xi32>
    %26 = vector.broadcast %25 : vector<1x128xi32> to vector<128x128xi32>
    %27 = arith.cmpi eq, %0, %26 : vector<128x128xi32>
    %28 = arith.ori %15, %27 : vector<128x128xi1>
    %c2 = arith.constant 2 : index
    %c0_7 = arith.constant 0 : index
    %29 = vector.load %arg1[%c2, %c0_7] : memref<3x128xi32, #tpu.memory_space<vmem>>, vector<1x128xi32>
    %c0_i32_8 = arith.constant 0 : i32
    %30 = vector.broadcast %c0_i32_8 : i32 to vector<1x128xi32>
    %31 = arith.cmpi sge, %29, %30 : vector<1x128xi32>
    %c16_i32_9 = arith.constant 16 : i32
    %32 = vector.broadcast %c16_i32_9 : i32 to vector<1x128xi32>
    %33 = arith.cmpi slt, %29, %32 : vector<1x128xi32>
    %34 = arith.andi %31, %33 : vector<1x128xi1>
    %c32_i32 = arith.constant 32 : i32
    %35 = vector.broadcast %c32_i32 : i32 to vector<1x128xi32>
    %36 = arith.addi %29, %35 : vector<1x128xi32>
    %c-1_i32_10 = arith.constant -1 : i32
    %37 = vector.broadcast %c-1_i32_10 : i32 to vector<1x128xi32>
    %38 = arith.select %34, %36, %37 : vector<1x128xi1>, vector<1x128xi32>
    %39 = vector.broadcast %38 : vector<1x128xi32> to vector<128x128xi32>
    %40 = arith.cmpi eq, %0, %39 : vector<128x128xi32>
    %41 = arith.ori %28, %40 : vector<128x128xi1>
    %42 = arith.extui %41 : vector<128x128xi1> to vector<128x128xi32>
    %43 = arith.sitofp %42 : vector<128x128xi32> to vector<128x128xf32>
    %44 = arith.truncf %43 : vector<128x128xf32> to vector<128x128xbf16>
    %c0_11 = arith.constant 0 : index
    %c0_12 = arith.constant 0 : index
    %45 = vector.load %arg2[%c0_11, %c0_12] : memref<32x128xbf16, #tpu.memory_space<vmem>>, vector<32x128xbf16>
    %cst = arith.constant dense<0.000000e+00> : vector<32x128xf32>
    %46 = tpu.matmul %45, %44, %cst {dimension_numbers = #tpu.dot_dimension_numbers<[1], [0], [0], [1], [0, 0, 1, 1], [], []>} : vector<32x128xbf16>, vector<128x128xbf16>, vector<32x128xf32> -> vector<32x128xf32>
    %cst_13 = arith.constant 0.000000e+00 : f32
    %47 = vector.broadcast %cst_13 : f32 to vector<32x128xf32>
    %48 = arith.maximumf %46, %47 : vector<32x128xf32>
    %c0_14 = arith.constant 0 : index
    %c0_15 = arith.constant 0 : index
    %49 = vector.load %arg3[%c0_14, %c0_15] : memref<32x1xf32, #tpu.memory_space<vmem>>, vector<32x1xf32>
    %50 = vector.broadcast %49 : vector<32x1xf32> to vector<32x128xf32>
    %51 = arith.mulf %48, %50 : vector<32x128xf32>
    %cst_16 = arith.constant dense<0.000000e+00> : vector<128xf32>
    %52 = vector.multi_reduction <add>, %51, %cst_16 [0] : vector<32x128xf32> to vector<128xf32>
    %53 = vector.shape_cast %52 : vector<128xf32> to vector<1x128xf32>
    %c0_17 = arith.constant 0 : index
    %54 = memref.load %arg4[%c0_17] : memref<1xf32, #tpu.memory_space<smem>>
    %55 = vector.broadcast %54 : f32 to vector<1x128xf32>
    %56 = arith.addf %53, %55 : vector<1x128xf32>
    %57 = arith.negf %56 : vector<1x128xf32>
    %58 = math.exp %57 : vector<1x128xf32>
    %cst_18 = arith.constant 1.000000e+00 : f32
    %59 = vector.broadcast %cst_18 : f32 to vector<1x128xf32>
    %60 = arith.addf %59, %58 : vector<1x128xf32>
    %61 = arith.divf %59, %60 : vector<1x128xf32>
    %c0_19 = arith.constant 0 : index
    %c0_20 = arith.constant 0 : index
    %62 = vector.load %arg5[%c0_19, %c0_20] : memref<1x128xf32, #tpu.memory_space<vmem>>, vector<1x128xf32>
    tpu.vector_store %arg5[%c0_19, %c0_20], %61 {strides = array<i32>} : memref<1x128xf32, #tpu.memory_space<vmem>>, vector<1x128xf32>,
    return
  }
  func.func @transform_0(%arg0: i32) -> (i32, i32) {
    %c0_i32 = arith.constant 0 : i32
    %c0_i32_0 = arith.constant 0 : i32
    return %c0_i32, %arg0 : i32, i32
  }
  func.func @transform_1(%arg0: i32) -> (i32, i32) {
    %c0_i32 = arith.constant 0 : i32
    %c0_i32_0 = arith.constant 0 : i32
    %c0_i32_1 = arith.constant 0 : i32
    return %c0_i32, %c0_i32_0 : i32, i32
  }
  func.func @transform_2(%arg0: i32) -> (i32, i32) {
    %c0_i32 = arith.constant 0 : i32
    %c0_i32_0 = arith.constant 0 : i32
    %c0_i32_1 = arith.constant 0 : i32
    return %c0_i32, %c0_i32_0 : i32, i32
  }
  func.func @transform_3(%arg0: i32) -> i32 {
    %c0_i32 = arith.constant 0 : i32
    %c0_i32_0 = arith.constant 0 : i32
    return %c0_i32 : i32
  }
  func.func @transform_4(%arg0: i32) -> (i32, i32) {
    %c0_i32 = arith.constant 0 : i32
    %c0_i32_0 = arith.constant 0 : i32
    return %c0_i32, %arg0 : i32, i32
  }
}

</mosaic_0001>

<llo_original>
// kernel: nn_predictor_forward.1
$region0: #{nn_predictor_forward.1}
  #allocation0 [shape = 'u32[]', space=smem, size = 0x4, offset = 0x4, fixed_abs, tag = 'smem constant byte address 0x4 - core index']
  #allocation1 [shape = 'u32[144,128]{1,0:T(1,128)}', space=vmem, size = 0x12000, scoped, tag = 'internal scratch']
  #allocation2 [shape = 'f32[1]{0:T(128)S(6)}', space=smem, size = 0x200, scoped, tag = 'scoped memory for nn_predictor_forward.1']
  %s0 = inlined_call_operand.vmem [shape: s32[3,128], index: 0, kind: input, shape index: {}]
  %s1 = inlined_call_operand.vmem [shape: bf16[32,128], index: 1, kind: input, shape index: {}]
  %s2 = inlined_call_operand.vmem [shape: f32[32,1], index: 2, kind: input, shape index: {}]
  %s3 = inlined_call_operand.<no memory space> [shape: f32[1], index: 3, kind: input, shape index: {}]
  %s4 = inlined_call_operand.vmem [shape: f32[1,128], index: 4, kind: output, shape index: {}]
  %s5 = sld [smem:[#allocation0]]
  $region26: #{nn_predictor_forward.1} parent=0
    _
  %s7 = ssub.s32 1, %s5
  %s8 = scalar_select 0, %s7, %s5
  %9 = sst [smem:[#allocation2]] %s3
  // Predicated region
  $region2: #{nn_predictor_forward.1} parent=0 // pred_check
    _
  $region3: #{nn_predictor_forward.1} parent=0 // pred_check_branch
    %11 = sbr.rel (0) target = $region5
  $region4: #{nn_predictor_forward.1} parent=0 // pred_region
    _
  $region5: #{nn_predictor_forward.1} parent=0 // pred_fallthru
    _
  // Predicated region
  $region6: #{nn_predictor_forward.1} parent=0 // pred_check
    _
  $region7: #{nn_predictor_forward.1} parent=0 // pred_check_branch
    %13 = sbr.rel (0) target = $region9
  $region8: #{nn_predictor_forward.1} parent=0 // pred_region
    _
  $region9: #{nn_predictor_forward.1} parent=0 // pred_fallthru
    _
  // Predicated region
  $region10: #{nn_predictor_forward.1} parent=0 // pred_check
    _
  $region11: #{nn_predictor_forward.1} parent=0 // pred_check_branch
    %15 = sbr.rel (0) target = $region13
  $region12: #{nn_predictor_forward.1} parent=0 // pred_region
    _
  $region13: #{nn_predictor_forward.1} parent=0 // pred_fallthru
    _
  // Predicated region
  $region14: #{nn_predictor_forward.1} parent=0 // pred_check
    _
  $region15: #{nn_predictor_forward.1} parent=0 // pred_check_branch
    %17 = sbr.rel (0) target = $region17
  $region16: #{nn_predictor_forward.1} parent=0 // pred_region
    _
  $region17: #{nn_predictor_forward.1} parent=0 // pred_fallthru
    _
  %v19 = vlaneseq
  %v20 = vshrl.u32 %v19, 7
  %v21 = vadd.s32 %v20, 8
  %v22 = vadd.s32 %v20, 16
  %v23 = vadd.s32 %v20, 24
  %v24 = vadd.s32 %v20, 32
  %v25 = vadd.s32 %v20, 40
  %v26 = vadd.s32 %v20, 48
  %v27 = vadd.s32 %v20, 56
  %v28 = vadd.s32 %v20, 64
  %v29 = vadd.s32 %v20, 72
  %v30 = vadd.s32 %v20, 80
  %v31 = vadd.s32 %v20, 88
  %v32 = vadd.s32 %v20, 96
  %v33 = vadd.s32 %v20, 104
  %v34 = vadd.s32 %v20, 112
  %v35 = vadd.s32 %v20, 120
  %vm36 = vcmp.eq.s32.totalorder %v20, 48
  %vm37 = vcmp.eq.s32.totalorder %v21, 48
  %vm38 = vcmp.eq.s32.totalorder %v22, 48
  %vm39 = vcmp.eq.s32.totalorder %v23, 48
  %vm40 = vcmp.eq.s32.totalorder %v24, 48
  %vm41 = vcmp.eq.s32.totalorder %v25, 48
  %vm42 = vcmp.eq.s32.totalorder %v26, 48
  %vm43 = vcmp.eq.s32.totalorder %v27, 48
  %vm44 = vcmp.eq.s32.totalorder %v28, 48
  %vm45 = vcmp.eq.s32.totalorder %v29, 48
  %vm46 = vcmp.eq.s32.totalorder %v30, 48
  %vm47 = vcmp.eq.s32.totalorder %v31, 48
  %vm48 = vcmp.eq.s32.totalorder %v32, 48
  %vm49 = vcmp.eq.s32.totalorder %v33, 48
  %vm50 = vcmp.eq.s32.totalorder %v34, 48
  %vm51 = vcmp.eq.s32.totalorder %v35, 48
  %v52 = vld [vmem:[%s0] sm:$0x1]
  %vm53 = vcmp.ge.s32.totalorder %v52, 0
  %vm54 = vcmp.lt.s32.totalorder %v52, 16
  %vm55 = vmand %vm53, %vm54
  %v56 = vsel %vm55, %v52, 4294967295
  %v57 = vlaneseq
  %v58 = vshrl.u32 %v57, 7
  %v59 = vsub.s32 0, %v58
  %v60 = vrot.slane %v56, %v59
  %vm61 = vcmp.eq.s32.totalorder %v20, %v60
  %vm62 = vcmp.eq.s32.totalorder %v21, %v60
  %vm63 = vcmp.eq.s32.totalorder %v22, %v60
  %vm64 = vcmp.eq.s32.totalorder %v23, %v60
  %vm65 = vcmp.eq.s32.totalorder %v24, %v60
  %vm66 = vcmp.eq.s32.totalorder %v25, %v60
  %vm67 = vcmp.eq.s32.totalorder %v26, %v60
  %vm68 = vcmp.eq.s32.totalorder %v27, %v60
  %vm69 = vcmp.eq.s32.totalorder %v28, %v60
  %vm70 = vcmp.eq.s32.totalorder %v29, %v60
  %vm71 = vcmp.eq.s32.totalorder %v30, %v60
  %vm72 = vcmp.eq.s32.totalorder %v31, %v60
  %vm73 = vcmp.eq.s32.totalorder %v32, %v60
  %vm74 = vcmp.eq.s32.totalorder %v33, %v60
  %vm75 = vcmp.eq.s32.totalorder %v34, %v60
  %vm76 = vcmp.eq.s32.totalorder %v35, %v60
  %vm77 = vmor %vm36, %vm61
  %vm78 = vmor %vm37, %vm62
  %vm79 = vmor %vm38, %vm63
  %vm80 = vmor %vm39, %vm64
  %vm81 = vmor %vm40, %vm65
  %vm82 = vmor %vm41, %vm66
  %vm83 = vmor %vm42, %vm67
  %vm84 = vmor %vm43, %vm68
  %vm85 = vmor %vm44, %vm69
  %vm86 = vmor %vm45, %vm70
  %vm87 = vmor %vm46, %vm71
  %vm88 = vmor %vm47, %vm72
  %vm89 = vmor %vm48, %vm73
  %vm90 = vmor %vm49, %vm74
  %vm91 = vmor %vm50, %vm75
  %vm92 = vmor %vm51, %vm76
  %v93 = vld [vmem:[%s0 + $0x1] sm:$0x1]
  %vm94 = vcmp.ge.s32.totalorder %v93, 0
  %vm95 = vcmp.lt.s32.totalorder %v93, 16
  %vm96 = vmand %vm94, %vm95
  %v97 = vadd.s32 %v93, 16
  %v98 = vsel %vm96, %v97, 4294967295
  %v99 = vlaneseq
  %v100 = vshrl.u32 %v99, 7
  %v101 = vsub.s32 0, %v100
  %v102 = vrot.slane %v98, %v101
  %vm103 = vcmp.eq.s32.totalorder %v20, %v102
  %vm104 = vcmp.eq.s32.totalorder %v21, %v102
  %vm105 = vcmp.eq.s32.totalorder %v22, %v102
  %vm106 = vcmp.eq.s32.totalorder %v23, %v102
  %vm107 = vcmp.eq.s32.totalorder %v24, %v102
  %vm108 = vcmp.eq.s32.totalorder %v25, %v102
  %vm109 = vcmp.eq.s32.totalorder %v26, %v102
  %vm110 = vcmp.eq.s32.totalorder %v27, %v102
  %vm111 = vcmp.eq.s32.totalorder %v28, %v102
  %vm112 = vcmp.eq.s32.totalorder %v29, %v102
  %vm113 = vcmp.eq.s32.totalorder %v30, %v102
  %vm114 = vcmp.eq.s32.totalorder %v31, %v102
  %vm115 = vcmp.eq.s32.totalorder %v32, %v102
  %vm116 = vcmp.eq.s32.totalorder %v33, %v102
  %vm117 = vcmp.eq.s32.totalorder %v34, %v102
  %vm118 = vcmp.eq.s32.totalorder %v35, %v102
  %vm119 = vmor %vm77, %vm103
  %vm120 = vmor %vm78, %vm104
  %vm121 = vmor %vm79, %vm105
  %vm122 = vmor %vm80, %vm106
  %vm123 = vmor %vm81, %vm107
  %vm124 = vmor %vm82, %vm108
  %vm125 = vmor %vm83, %vm109
  %vm126 = vmor %vm84, %vm110
  %vm127 = vmor %vm85, %vm111
  %vm128 = vmor %vm86, %vm112
  %vm129 = vmor %vm87, %vm113
  %vm130 = vmor %vm88, %vm114
  %vm131 = vmor %vm89, %vm115
  %vm132 = vmor %vm90, %vm116
  %vm133 = vmor %vm91, %vm117
  %vm134 = vmor %vm92, %vm118
  %v135 = vld [vmem:[%s0 + $0x2] sm:$0x1]
  %vm136 = vcmp.ge.s32.totalorder %v135, 0
  %vm137 = vcmp.lt.s32.totalorder %v135, 16
  %vm138 = vmand %vm136, %vm137
  %v139 = vadd.s32 %v135, 32
  %v140 = vsel %vm138, %v139, 4294967295
  %v141 = vlaneseq
  %v142 = vshrl.u32 %v141, 7
  %v143 = vsub.s32 0, %v142
  %v144 = vrot.slane %v140, %v143
  %vm145 = vcmp.eq.s32.totalorder %v20, %v144
  %vm146 = vcmp.eq.s32.totalorder %v21, %v144
  %vm147 = vcmp.eq.s32.totalorder %v22, %v144
  %vm148 = vcmp.eq.s32.totalorder %v23, %v144
  %vm149 = vcmp.eq.s32.totalorder %v24, %v144
  %vm150 = vcmp.eq.s32.totalorder %v25, %v144
  %vm151 = vcmp.eq.s32.totalorder %v26, %v144
  %vm152 = vcmp.eq.s32.totalorder %v27, %v144
  %vm153 = vcmp.eq.s32.totalorder %v28, %v144
  %vm154 = vcmp.eq.s32.totalorder %v29, %v144
  %vm155 = vcmp.eq.s32.totalorder %v30, %v144
  %vm156 = vcmp.eq.s32.totalorder %v31, %v144
  %vm157 = vcmp.eq.s32.totalorder %v32, %v144
  %vm158 = vcmp.eq.s32.totalorder %v33, %v144
  %vm159 = vcmp.eq.s32.totalorder %v34, %v144
  %vm160 = vcmp.eq.s32.totalorder %v35, %v144
  %vm161 = vmor %vm119, %vm145
  %vm162 = vmor %vm120, %vm146
  %vm163 = vmor %vm121, %vm147
  %vm164 = vmor %vm122, %vm148
  %vm165 = vmor %vm123, %vm149
  %vm166 = vmor %vm124, %vm150
  %vm167 = vmor %vm125, %vm151
  %vm168 = vmor %vm126, %vm152
  %vm169 = vmor %vm127, %vm153
  %vm170 = vmor %vm128, %vm154
  %vm171 = vmor %vm129, %vm155
  %vm172 = vmor %vm130, %vm156
  %vm173 = vmor %vm131, %vm157
  %vm174 = vmor %vm132, %vm158
  %vm175 = vmor %vm133, %vm159
  %vm176 = vmor %vm134, %vm160
  %v177 = vsel %vm161, 1, 0
  %v178 = vsel %vm162, 1, 0
  %v179 = vsel %vm163, 1, 0
  %v180 = vsel %vm164, 1, 0
  %v181 = vsel %vm165, 1, 0
  %v182 = vsel %vm166, 1, 0
  %v183 = vsel %vm167, 1, 0
  %v184 = vsel %vm168, 1, 0
  %v185 = vsel %vm169, 1, 0
  %v186 = vsel %vm170, 1, 0
  %v187 = vsel %vm171, 1, 0
  %v188 = vsel %vm172, 1, 0
  %v189 = vsel %vm173, 1, 0
  %v190 = vsel %vm174, 1, 0
  %v191 = vsel %vm175, 1, 0
  %v192 = vsel %vm176, 1, 0
  %v193 = vcvt.s32.f32 %v177
  %v194 = vcvt.s32.f32 %v178
  %v195 = vcvt.s32.f32 %v179
  %v196 = vcvt.s32.f32 %v180
  %v197 = vcvt.s32.f32 %v181
  %v198 = vcvt.s32.f32 %v182
  %v199 = vcvt.s32.f32 %v183
  %v200 = vcvt.s32.f32 %v184
  %v201 = vcvt.s32.f32 %v185
  %v202 = vcvt.s32.f32 %v186
  %v203 = vcvt.s32.f32 %v187
  %v204 = vcvt.s32.f32 %v188
  %v205 = vcvt.s32.f32 %v189
  %v206 = vcvt.s32.f32 %v190
  %v207 = vcvt.s32.f32 %v191
  %v208 = vcvt.s32.f32 %v192
  %v209 = vpack.c.bf16 %v194, %v193
  %v210 = vpack.c.bf16 %v196, %v195
  %v211 = vpack.c.bf16 %v198, %v197
  %v212 = vpack.c.bf16 %v200, %v199
  %v213 = vpack.c.bf16 %v202, %v201
  %v214 = vpack.c.bf16 %v204, %v203
  %v215 = vpack.c.bf16 %v206, %v205
  %v216 = vpack.c.bf16 %v208, %v207
  %v217 = vld [vmem:[%s1] sm:$0xf]
  %v218 = vld [vmem:[%s1 + $0x4] sm:$0xf]
  %v219 = vld [vmem:[%s1 + $0x8] sm:$0xf]
  %v220 = vld [vmem:[%s1 + $0xc] sm:$0xf]
  %v225 = vunpack.c.l.b16 %v217
  %v226 = vunpack.c.l.b16 %v218
  %v227 = vunpack.c.l.b16 %v219
  %v228 = vunpack.c.l.b16 %v220
  %v229 = vpack.c.b16 %v226, %v225
  %v230 = vpack.c.b16 %v228, %v227
  %233 = vmatprep.subr.bf16.mxu0 0
  %234 = vmatpush1.bf16.msra.mxu0 %v209
  %235 = vmatprep.subr.bf16.mxu0 0
  %236 = vmatpush1.bf16.msra.mxu0 %v210
  %237 = vmatprep.subr.bf16.mxu0 0
  %238 = vmatpush1.bf16.msra.mxu0 %v211
  %239 = vmatprep.subr.bf16.mxu0 0
  %240 = vmatpush1.bf16.msra.mxu0 %v212
  %241 = vmatprep.subr.bf16.mxu0 0
  %242 = vmatpush1.bf16.msra.mxu0 %v213
  %243 = vmatprep.subr.bf16.mxu0 0
  %244 = vmatpush1.bf16.msra.mxu0 %v214
  %245 = vmatprep.subr.bf16.mxu0 0
  %246 = vmatpush1.bf16.msra.mxu0 %v215
  %247 = vmatprep.subr.bf16.mxu0 0
  %248 = vmatpush1.bf16.msra.mxu0 %v216
  %249 = vmatprep.subr.bf16.mxu0 0
  %250 = vmatpush1.bf16.msra.mxu0 0
  %251 = vmatprep.subr.bf16.mxu0 0
  %252 = vmatpush1.bf16.msra.mxu0 0
  %253 = vmatprep.subr.bf16.mxu0 0
  %254 = vmatpush1.bf16.msra.mxu0 0
  %255 = vmatprep.subr.bf16.mxu0 0
  %256 = vmatpush1.bf16.msra.mxu0 0
  %257 = vmatprep.subr.bf16.mxu0 0
  %258 = vmatpush1.bf16.msra.mxu0 0
  %259 = vmatprep.subr.bf16.mxu0 0
  %260 = vmatpush1.bf16.msra.mxu0 0
  %261 = vmatprep.subr.bf16.mxu0 0
  %262 = vmatpush1.bf16.msra.mxu0 0
  %263 = vmatprep.subr.bf16.mxu0 0
  %264 = vmatpush1.bf16.msra.mxu0 0
  %265 = vmatprep.mubr.bf16.mxu0 0
  %266 = vmatmul.mubr.bf16.gmra.mrb[0].mxu0 %v229
  %v267 = vpop.f32.mrb[0].mxu0
  %v268 = vadd.f32 0.0, %v267
  %v269 = vpop.f32.mrb[0].mxu0
  %v270 = vpop.f32.mrb[0].mxu0
  %v271 = vadd.f32 0.0, %v270
  %v272 = vpop.f32.mrb[0].mxu0
  %273 = vmatprep.mubr.bf16.mxu0 0
  %274 = vmatmul.mubr.bf16.gmra.mrb[0].mxu0 %v230
  %v275 = vpop.f32.mrb[0].mxu0
  %v276 = vadd.f32 0.0, %v275
  %v277 = vpop.f32.mrb[0].mxu0
  %v278 = vpop.f32.mrb[0].mxu0
  %v279 = vadd.f32 0.0, %v278
  %v280 = vpop.f32.mrb[0].mxu0
  %281 = vdwg.mxu0
  %v282 = vmax.f32 %v268, 0.0
  %v283 = vmax.f32 %v271, 0.0
  %v284 = vmax.f32 %v276, 0.0
  %v285 = vmax.f32 %v279, 0.0
  %v286 = vld [vmem:[%s2] sm:$0xff]
  %v287 = vld [vmem:[%s2 + $0x8] sm:$0xff]
  %v288 = vld [vmem:[%s2 + $0x10] sm:$0xff]
  %v289 = vld [vmem:[%s2 + $0x18] sm:$0xff]
  %291 = vset.pattern.permute.xlu0 0
  %292 = vperm.xlu0 %291, %v286
  %v293 = vpop.permute.xlu0 %292
  %296 = vset.pattern.permute.xlu0 0
  %297 = vperm.xlu0 %296, %v287
  %v298 = vpop.permute.xlu0 %297
  %301 = vset.pattern.permute.xlu0 0
  %302 = vperm.xlu0 %301, %v288
  %v303 = vpop.permute.xlu0 %302
  %306 = vset.pattern.permute.xlu0 0
  %307 = vperm.xlu0 %306, %v289
  %v308 = vpop.permute.xlu0 %307
  %v310 = vmul.f32 %v282, %v293
  %v311 = vmul.f32 %v283, %v298
  %v312 = vmul.f32 %v284, %v303
  %v313 = vmul.f32 %v285, %v308
  %v314 = vadd.f32 %v310, %v311
  %v315 = vadd.f32 %v314, %v312
  %v316 = vadd.f32 %v315, %v313
  %v317 = vrot.slane %v316, 4
  %v318 = vadd.f32 %v316, %v317
  %v319 = vrot.slane %v318, 2
  %v320 = vadd.f32 %v318, %v319
  %v321 = vrot.slane %v320, 1
  %v322 = vadd.f32 %v320, %v321
  %s323 = sld [smem:[#allocation2]]
  %v324 = vstv %s323
  %v325 = vadd.f32 %v322, %v324
  %v326 = vxor.u32 %v325, 2147483648
  %v327 = vmul.f32 %v326, 1.442695
  %v328 = vpow.pop %v327
  %v329 = vadd.f32 %v328, 1.0
  %v330 = vrcp.pop %v329
  %v331 = vmul.f32 1.0, %v330
  %332 = vst [vmem:[%s4] sm:$0x1] %v331
  // Predicated region
  $region18: #{nn_predictor_forward.1} parent=0 // pred_check
    _
  $region19: #{nn_predictor_forward.1} parent=0 // pred_check_branch
    %334 = sbr.rel (0) target = $region21
  $region20: #{nn_predictor_forward.1} parent=0 // pred_region
    _
  $region21: #{nn_predictor_forward.1} parent=0 // pred_fallthru
    _
  // Predicated region
  $region22: #{nn_predictor_forward.1} parent=0 // pred_check
    _
  $region23: #{nn_predictor_forward.1} parent=0 // pred_check_branch
    %336 = sbr.rel (0) target = $region25
  $region24: #{nn_predictor_forward.1} parent=0 // pred_region
    _
  $region25: #{nn_predictor_forward.1} parent=0 // pred_fallthru
    _

</llo_original>
